<compile_context>
chip_gen: v6e
topology: v6e:2x2x1
jax: 0.10.0
libtpu: 0.0.40
codegen_flags: <defaults>
</compile_context>

<pallas_src>
import functools
import math

import jax
import jax.numpy as jnp
from jax.experimental import pallas as pl
from jax.experimental.pallas import tpu as pltpu


# ----------------------------- small helpers -----------------------------

def _ln(x, g, b, eps):
    """f32 layernorm over the last axis with affine (g, b) broadcast from (1, C)."""
    x = x.astype(jnp.float32)
    mean = jnp.mean(x, axis=-1, keepdims=True)
    var = jnp.mean(jnp.square(x - mean), axis=-1, keepdims=True)
    return (x - mean) * jax.lax.rsqrt(var + eps) * g.astype(jnp.float32) + b.astype(jnp.float32)


def _row_tile(n, target):
    """Row tile: full dim if small, else `target` (multiple of 8); cdiv grid handles tails."""
    return n if n <= target else target


def _col_tile(n, target):
    """Lane tile: full dim if small, else `target` (multiple of 128); cdiv grid handles tails."""
    return n if n <= target else target


def _nbytes(shape, dtype):
    return int(math.prod(shape)) * jnp.dtype(dtype).itemsize


def _vmem_limit(*nbytes):
    """Explicit scoped-VMEM budget: 2x (double-buffered pipeline blocks) + margin."""
    budget = 2 * sum(int(x) for x in nbytes) + (8 << 20)
    return int(min(max(budget, 32 << 20), 112 << 20))


# ----------------------------- fused layernorm + linear (N-tiled weight) -----------------------------
# norm1 fused into the q projection (no bias on to_q/to_k).  Weight is bf16 and tiled
# over output columns; activations cast to bf16 only at the dot, accumulate in f32.

def _norm_linear_kernel(x_ref, g_ref, b_ref, w_ref, o_ref, *, eps):
    xn = _ln(x_ref[...], g_ref[...], b_ref[...], eps).astype(jnp.bfloat16)
    o_ref[...] = jnp.dot(xn, w_ref[...], preferred_element_type=jnp.float32).astype(o_ref.dtype)


def norm_linear(x, g, b, w_bf16, *, eps, out_dtype=jnp.bfloat16,
                block_rows=512, block_cols=1024):
    rows, c = x.shape
    n = w_bf16.shape[1]
    br = _row_tile(rows, block_rows)
    tn = _col_tile(n, block_cols)
    vmem = _vmem_limit(_nbytes((br, c), x.dtype), 2 * _nbytes((1, c), jnp.float32),
                       _nbytes((c, tn), jnp.bfloat16), _nbytes((br, tn), out_dtype))
    return pl.pallas_call(
        functools.partial(_norm_linear_kernel, eps=eps),
        out_shape=jax.ShapeDtypeStruct((rows, n), out_dtype),
        grid=(pl.cdiv(rows, br), pl.cdiv(n, tn)),
        in_specs=[
            pl.BlockSpec((br, c), lambda i, j: (i, 0)),
            pl.BlockSpec((1, c), lambda i, j: (0, 0)),
            pl.BlockSpec((1, c), lambda i, j: (0, 0)),
            pl.BlockSpec((c, tn), lambda i, j: (0, j)),
        ],
        out_specs=pl.BlockSpec((br, tn), lambda i, j: (i, j)),
        compiler_params=pltpu.CompilerParams(
            dimension_semantics=("parallel", "parallel"),
            vmem_limit_bytes=vmem),
    )(x, g.reshape(1, c), b.reshape(1, c), w_bf16)


# ----------------------------- norm1 + to_k with control-frame gather (scalar prefetch) -----------------------------
# The control-frame indices live in SMEM (num_scalar_prefetch=1) and are consumed by the
# input index_map, so the gathered (B, Tc*L, C) key rows never exist in HBM.  LayerNorm is
# row-wise, so gathering before norm1 is identical to gathering after it.

def _norm_linear_gather_kernel(cfi_ref, x_ref, g_ref, b_ref, w_ref, o_ref, *, eps):
    del cfi_ref  # consumed only by the index_maps
    xn = _ln(x_ref[...], g_ref[...], b_ref[...], eps).astype(jnp.bfloat16)
    o_ref[...] = jnp.dot(xn, w_ref[...], preferred_element_type=jnp.float32).astype(o_ref.dtype)


def norm_linear_gather_frames(x_btlc, cfi, g, b, w_bf16, *, eps, out_dtype=jnp.bfloat16,
                              block_rows=512, block_cols=1024):
    B, T, L, c = x_btlc.shape
    tc = int(cfi.shape[0])
    n = w_bf16.shape[1]
    brl = _row_tile(L, block_rows)
    tn = _col_tile(n, block_cols)
    vmem = _vmem_limit(_nbytes((brl, c), x_btlc.dtype), 2 * _nbytes((1, c), jnp.float32),
                       _nbytes((c, tn), jnp.bfloat16), _nbytes((brl, tn), out_dtype))
    out = pl.pallas_call(
        functools.partial(_norm_linear_gather_kernel, eps=eps),
        out_shape=jax.ShapeDtypeStruct((B, tc, L, n), out_dtype),
        grid_spec=pltpu.PrefetchScalarGridSpec(
            num_scalar_prefetch=1,
            grid=(B, tc, pl.cdiv(L, brl), pl.cdiv(n, tn)),
            in_specs=[
                pl.BlockSpec((None, None, brl, c),
                             lambda bb, t, li, j, cfi_ref: (bb, cfi_ref[t], li, 0)),
                pl.BlockSpec((1, c), lambda bb, t, li, j, cfi_ref: (0, 0)),
                pl.BlockSpec((1, c), lambda bb, t, li, j, cfi_ref: (0, 0)),
                pl.BlockSpec((c, tn), lambda bb, t, li, j, cfi_ref: (0, j)),
            ],
            out_specs=pl.BlockSpec((None, None, brl, tn),
                                   lambda bb, t, li, j, cfi_ref: (bb, t, li, j)),
        ),
        compiler_params=pltpu.CompilerParams(
            dimension_semantics=("parallel", "parallel", "parallel", "parallel"),
            vmem_limit_bytes=vmem),
    )(cfi, x_btlc, g.reshape(1, c), b.reshape(1, c), w_bf16)
    return out.reshape(B, tc * L, n)


# ----------------------------- plain linear (bf16 MXU, N-tiled weight) -----------------------------

def _linear_kernel(x_ref, w_ref, b_ref, o_ref):
    acc = jnp.dot(x_ref[...].astype(jnp.bfloat16), w_ref[...],
                  preferred_element_type=jnp.float32)
    o_ref[...] = (acc + b_ref[...].astype(jnp.float32)).astype(o_ref.dtype)


def linear(x, w_bf16, bias=None, *, out_dtype=jnp.bfloat16,
           block_rows=512, block_cols=1024):
    rows, k = x.shape
    n = w_bf16.shape[1]
    if bias is None:
        bias = jnp.zeros((n,), jnp.float32)
    br = _row_tile(rows, block_rows)
    tn = _col_tile(n, block_cols)
    vmem = _vmem_limit(_nbytes((br, k), x.dtype), _nbytes((k, tn), jnp.bfloat16),
                       _nbytes((1, tn), jnp.float32), _nbytes((br, tn), out_dtype))
    return pl.pallas_call(
        _linear_kernel,
        out_shape=jax.ShapeDtypeStruct((rows, n), out_dtype),
        grid=(pl.cdiv(rows, br), pl.cdiv(n, tn)),
        in_specs=[
            pl.BlockSpec((br, k), lambda i, j: (i, 0)),
            pl.BlockSpec((k, tn), lambda i, j: (0, j)),
            pl.BlockSpec((1, tn), lambda i, j: (0, j)),
        ],
        out_specs=pl.BlockSpec((br, tn), lambda i, j: (i, j)),
        compiler_params=pltpu.CompilerParams(
            dimension_semantics=("parallel", "parallel"),
            vmem_limit_bytes=vmem),
    )(x, w_bf16, bias.reshape(1, n))


# ----------------------------- fused cross-attention (merged-head layout) -----------------------------
# q/k/v stay in (B, S, H*D).  Grid = (batch, head-group, q-tile).  The head group width
# hg*D is a multiple of 128 lanes (or the full H*D), so output stores are lane-dense.
# qk layer-norm (eps=1e-6) per head, 1/sqrt(d) folded into the q affine; K layer-norm
# computed once per (batch, head-group) into VMEM scratch (constant across q tiles).

def _heads_per_group(heads, head_dim):
    if (heads * head_dim) % 128 != 0:
        return heads                              # take all heads -> full lane dim
    for hg in range(1, heads + 1):
        if heads % hg == 0 and (hg * head_dim) % 128 == 0:
            return hg
    return heads


def _attn_kernel(q_ref, k_ref, v_ref, gq_ref, bq_ref, gk_ref, bk_ref, o_ref, kn_sc,
                 *, eps, hg, d):
    qi = pl.program_id(2)

    @pl.when(qi == 0)
    def _():
        kn = [_ln(k_ref[:, h * d:(h + 1) * d], gk_ref[...], bk_ref[...], eps)
              .astype(jnp.bfloat16) for h in range(hg)]
        kn_sc[...] = jnp.concatenate(kn, axis=-1) if hg > 1 else kn[0]

    outs = []
    for h in range(hg):
        sl = slice(h * d, (h + 1) * d)
        q = _ln(q_ref[:, sl], gq_ref[...], bq_ref[...], eps).astype(jnp.bfloat16)  # scale folded
        k = kn_sc[:, sl]
        s = jax.lax.dot_general(q, k, (((1,), (1,)), ((), ())),
                                preferred_element_type=jnp.float32)                # (tq, sk)
        m = jnp.max(s, axis=-1, keepdims=True)
        p = jnp.exp(s - m)
        denom = jnp.sum(p, axis=-1, keepdims=True)
        o = jnp.dot(p.astype(jnp.bfloat16), v_ref[:, sl].astype(jnp.bfloat16),
                    preferred_element_type=jnp.float32)                            # (tq, d)
        outs.append(o * pl.reciprocal(denom, approx=True))
    o = jnp.concatenate(outs, axis=-1) if hg > 1 else outs[0]
    o_ref[...] = o.astype(o_ref.dtype)                                             # lane-dense store


def cross_attention(q, k, v, gq, bq, gk, bk, *, heads, head_dim, eps=1e-6):
    bsz, sq, hd = q.shape
    sk = k.shape[1]
    assert v.shape[1] == sk and hd == heads * head_dim
    d = head_dim
    hg = _heads_per_group(heads, d)
    groups = heads // hg
    hgd = hg * d
    scale = 1.0 / math.sqrt(d)
    gq_s = (gq.astype(jnp.float32) * scale).reshape(1, d)
    bq_s = (bq.astype(jnp.float32) * scale).reshape(1, d)
    # TODO(synk): tile sk with an online-softmax accumulator for very long key sequences;
    # here the key sequence (num_control_frames * tokens_per_frame) stays whole per block.
    tq = _row_tile(sq, 256 if sk <= 2048 else 128)
    vmem = _vmem_limit(_nbytes((tq, hgd), q.dtype),
                       2 * _nbytes((sk, hgd), k.dtype),
                       4 * _nbytes((1, d), jnp.float32),
                       _nbytes((tq, hgd), q.dtype),
                       _nbytes((sk, hgd), jnp.bfloat16),      # K-norm scratch
                       2 * _nbytes((tq, sk), jnp.float32))    # score working set
    return pl.pallas_call(
        functools.partial(_attn_kernel, eps=eps, hg=hg, d=d),
        out_shape=jax.ShapeDtypeStruct((bsz, sq, hd), q.dtype),
        grid=(bsz, groups, pl.cdiv(sq, tq)),
        in_specs=[
            pl.BlockSpec((None, tq, hgd), lambda b, g, qi: (b, qi, g)),
            pl.BlockSpec((None, sk, hgd), lambda b, g, qi: (b, 0, g)),
            pl.BlockSpec((None, sk, hgd), lambda b, g, qi: (b, 0, g)),
            pl.BlockSpec((1, d), lambda b, g, qi: (0, 0)),
            pl.BlockSpec((1, d), lambda b, g, qi: (0, 0)),
            pl.BlockSpec((1, d), lambda b, g, qi: (0, 0)),
            pl.BlockSpec((1, d), lambda b, g, qi: (0, 0)),
        ],
        out_specs=pl.BlockSpec((None, tq, hgd), lambda b, g, qi: (b, qi, g)),
        scratch_shapes=[pltpu.VMEM((sk, hgd), jnp.bfloat16)],
        compiler_params=pltpu.CompilerParams(
            dimension_semantics=("parallel", "parallel", "arbitrary"),
            vmem_limit_bytes=vmem),
    )(q, k, v, gq_s, bq_s, gk.reshape(1, d), bk.reshape(1, d))


# ----------------------------- fused norm2/norm3 + mask + (concat) + FeedForward -----------------------------
# out = gelu([norm2(attn)*sm , norm3(img)*im] @ w1 + b1) @ w2 + b2
# The channel concat never materializes: w1 is split into w1a (top C rows) and w1b
# (bottom C rows).  The FF inner dim is a reduction grid axis with an f32 accumulator.

def _tail_ff_kernel(attn_ref, img_ref, sm_ref, im_ref,
                    g2_ref, b2_ref, g3_ref, b3_ref,
                    w1a_ref, w1b_ref, b1_ref, w2_ref, bout_ref,
                    o_ref, a_sc, i_sc, acc_sc, *, eps):
    j = pl.program_id(1)

    @pl.when(j == 0)
    def _():
        a = _ln(attn_ref[...], g2_ref[...], b2_ref[...], eps) * sm_ref[...].astype(jnp.float32)
        im = _ln(img_ref[...], g3_ref[...], b3_ref[...], eps) * im_ref[...].astype(jnp.float32)
        a_sc[...] = a.astype(jnp.bfloat16)
        i_sc[...] = im.astype(jnp.bfloat16)
        acc_sc[...] = jnp.zeros_like(acc_sc)

    h = jnp.dot(a_sc[...], w1a_ref[...], preferred_element_type=jnp.float32)
    h = h + jnp.dot(i_sc[...], w1b_ref[...], preferred_element_type=jnp.float32)
    h = h + b1_ref[...].astype(jnp.float32)
    h = jax.nn.gelu(h, approximate=True)          # matches torch GELU(approximate='tanh')
    acc_sc[...] += jnp.dot(h.astype(jnp.bfloat16), w2_ref[...],
                           preferred_element_type=jnp.float32)

    @pl.when(j == pl.num_programs(1) - 1)
    def _():
        o_ref[...] = (acc_sc[...] + bout_ref[...].astype(jnp.float32)).astype(o_ref.dtype)


def _ff_inner_tile(inner, target=512):
    if inner <= target:
        return inner
    for ti in range(target, 127, -128):
        if inner % ti == 0:
            return ti
    raise ValueError("FF inner dim must be a multiple of 128 (prepare_params pads it).")


def norm_mask_ff(attn2d, img2d, sm2d, im2d, g2, b2, g3, b3,
                 w1a, w1b, b1, w2, bout, *, eps, out_dtype, block_rows=256):
    rows, c = attn2d.shape
    inner = w1a.shape[1]
    n = w2.shape[1]
    br = _row_tile(rows, block_rows)      # 256 keeps the v7x (64 MiB VMEM) budget comfortable
    ti = _ff_inner_tile(inner)
    vmem = _vmem_limit(
        _nbytes((br, c), attn2d.dtype), _nbytes((br, c), img2d.dtype),
        2 * _nbytes((br, 1), jnp.float32), 4 * _nbytes((1, c), jnp.float32),
        2 * _nbytes((c, ti), jnp.bfloat16), _nbytes((1, ti), jnp.float32),
        _nbytes((ti, n), jnp.bfloat16), _nbytes((1, n), jnp.float32),
        _nbytes((br, n), out_dtype),
        2 * _nbytes((br, c), jnp.bfloat16) + _nbytes((br, n), jnp.float32))  # scratch
    return pl.pallas_call(
        functools.partial(_tail_ff_kernel, eps=eps),
        out_shape=jax.ShapeDtypeStruct((rows, n), out_dtype),
        grid=(pl.cdiv(rows, br), inner // ti),
        in_specs=[
            pl.BlockSpec((br, c), lambda i, j: (i, 0)),   # attn (bf16 from wo projection)
            pl.BlockSpec((br, c), lambda i, j: (i, 0)),   # image hidden states
            pl.BlockSpec((br, 1), lambda i, j: (i, 0)),   # sketch mask
            pl.BlockSpec((br, 1), lambda i, j: (i, 0)),   # image mask
            pl.BlockSpec((1, c), lambda i, j: (0, 0)),    # norm2 g
            pl.BlockSpec((1, c), lambda i, j: (0, 0)),    # norm2 b
            pl.BlockSpec((1, c), lambda i, j: (0, 0)),    # norm3 g
            pl.BlockSpec((1, c), lambda i, j: (0, 0)),    # norm3 b
            pl.BlockSpec((c, ti), lambda i, j: (0, j)),   # ff w1 top half (bf16)
            pl.BlockSpec((c, ti), lambda i, j: (0, j)),   # ff w1 bottom half (bf16)
            pl.BlockSpec((1, ti), lambda i, j: (0, j)),   # ff b1
            pl.BlockSpec((ti, n), lambda i, j: (j, 0)),   # ff w2 (bf16)
            pl.BlockSpec((1, n), lambda i, j: (0, 0)),    # ff b2
        ],
        out_specs=pl.BlockSpec((br, n), lambda i, j: (i, 0)),
        scratch_shapes=[
            pltpu.VMEM((br, c), jnp.bfloat16),            # cached norm2(attn)*mask
            pltpu.VMEM((br, c), jnp.bfloat16),            # cached norm3(img)*mask
            pltpu.VMEM((br, n), jnp.float32),             # f32 accumulator
        ],
        compiler_params=pltpu.CompilerParams(
            dimension_semantics=("parallel", "arbitrary"),
            vmem_limit_bytes=vmem),
    )(attn2d, img2d, sm2d, im2d,
      g2.reshape(1, c), b2.reshape(1, c), g3.reshape(1, c), b3.reshape(1, c),
      w1a, w1b, b1.reshape(1, inner), w2, bout.reshape(1, n))


# ----------------------------- parameters -----------------------------

def init_params(key, dim, heads, head_dim):
    inner = heads * head_dim
    ff_inner = 2 * dim                      # FeedForward(dim*2, mult=1) -> inner = 2*dim
    ks = jax.random.split(key, 16)

    def w(k, shape, scale=0.05):
        return jax.random.normal(k, shape, jnp.float32) * scale

    return dict(
        norm1_g=1.0 + w(ks[0], (dim,), 0.1), norm1_b=w(ks[1], (dim,), 0.1),
        norm2_g=1.0 + w(ks[2], (dim,), 0.1), norm2_b=w(ks[3], (dim,), 0.1),
        norm3_g=1.0 + w(ks[4], (dim,), 0.1), norm3_b=w(ks[5], (dim,), 0.1),
        wq=w(ks[6], (dim, inner)), wk=w(ks[7], (dim, inner)), wv=w(ks[8], (dim, inner)),
        wo=w(ks[9], (inner, dim)), bo=w(ks[10], (dim,), 0.01),
        qnorm_g=1.0 + w(ks[11], (head_dim,), 0.1), qnorm_b=w(ks[12], (head_dim,), 0.1),
        knorm_g=1.0 + w(ks[13], (head_dim,), 0.1), knorm_b=w(ks[14], (head_dim,), 0.1),
        ff_w1=w(ks[15], (2 * dim, ff_inner)), ff_b1=jnp.zeros((ff_inner,), jnp.float32),
        ff_w2=w(jax.random.fold_in(key, 99), (ff_inner, dim)),
        ff_b2=jnp.zeros((dim,), jnp.float32),
    )


def prepare_params(p):
    """One-time prep: cast MXU weights to bf16, split ff_w1 into the two concat halves,
    zero-pad the FF inner dim to a multiple of 128 (zeros contribute nothing)."""
    # TODO(synk): optional fp8 weight quantization for the v7x MXU path.
    c = p["ff_w1"].shape[0] // 2
    inner = p["ff_w1"].shape[1]
    kp = dict(p)
    for name in ("wq", "wk", "wv", "wo"):
        kp[name] = p[name].astype(jnp.bfloat16)
    w1a, w1b = p["ff_w1"][:c], p["ff_w1"][c:]
    b1, w2 = p["ff_b1"], p["ff_w2"]
    if inner > 512 and inner % 128 != 0:
        pad = (-inner) % 128
        w1a = jnp.pad(w1a, ((0, 0), (0, pad)))
        w1b = jnp.pad(w1b, ((0, 0), (0, pad)))
        b1 = jnp.pad(b1, ((0, pad),))
        w2 = jnp.pad(w2, ((0, pad), (0, 0)))
    kp["ff_w1a"] = w1a.astype(jnp.bfloat16)
    kp["ff_w1b"] = w1b.astype(jnp.bfloat16)
    kp["ff_b1"] = b1
    kp["ff_w2"] = w2.astype(jnp.bfloat16)
    return kp


# ----------------------------- CrossFrameBlock forward -----------------------------

def cross_frame_block(kp, hidden_states, sketch_hidden_states, image_hidden_states,
                      sketch_mask, image_mask, control_frame_index, temb, num_frames,
                      heads, head_dim):
    del temb  # unused in the reference forward pass (kept for signature parity)
    B, S, C = hidden_states.shape
    L = S // num_frames
    inner = heads * head_dim
    cfi = jnp.asarray(control_frame_index, jnp.int32)
    Tc = int(cfi.shape[0])
    Sk = Tc * L
    Sv = sketch_hidden_states.shape[1]
    assert Sv == Sk, "sketch_hidden_states length must equal num_control_frames * tokens_per_frame"

    # --- fused norm1 + q/k projections; merged-head (B, S, H*D) layout (free reshapes).
    q = norm_linear(hidden_states.reshape(B * S, C),
                    kp["norm1_g"], kp["norm1_b"], kp["wq"], eps=1e-5).reshape(B, S, inner)
    # control-frame gather via scalar-prefetched index_map (key rows never hit HBM)
    k = norm_linear_gather_frames(hidden_states.reshape(B, num_frames, L, C), cfi,
                                  kp["norm1_g"], kp["norm1_b"], kp["wk"], eps=1e-5)  # (B, Sk, inner)
    v = linear(sketch_hidden_states.reshape(B * Sv, C), kp["wv"]).reshape(B, Sv, inner)

    # fused qk-layernorm + softmax(QK^T)V, heads handled inside (no HBM transposes)
    attn = cross_attention(q, k, v, kp["qnorm_g"], kp["qnorm_b"],
                           kp["knorm_g"], kp["knorm_b"],
                           heads=heads, head_dim=head_dim, eps=1e-6)                 # (B,S,H*D) bf16

    # output projection (out_bias=True); bf16 carried into the tail kernel
    attn = linear(attn.reshape(B * S, inner), kp["wo"], kp["bo"])                    # (B*S, C) bf16

    # fused: norm2(attn)*sketch_mask, norm3(img)*image_mask, concat-by-weight-split, FF
    out = norm_mask_ff(attn, image_hidden_states.reshape(B * S, C),
                       sketch_mask.reshape(B * S, 1), image_mask.reshape(B * S, 1),
                       kp["norm2_g"], kp["norm2_b"], kp["norm3_g"], kp["norm3_b"],
                       kp["ff_w1a"], kp["ff_w1b"], kp["ff_b1"], kp["ff_w2"], kp["ff_b2"],
                       eps=1e-5, out_dtype=hidden_states.dtype)
    return out.reshape(B, S, C)


# ----------------------------- pure-JAX reference (for the runtime check) -----------------------------

def cross_frame_block_reference(kp, hidden_states, sketch_hidden_states, image_hidden_states,
                                sketch_mask, image_mask, control_frame_index, num_frames,
                                heads, head_dim):
    B, S, C = hidden_states.shape
    L = S // num_frames
    f32 = jnp.float32

    def ln(x, g, b, eps):
        m = jnp.mean(x, -1, keepdims=True)
        v = jnp.mean(jnp.square(x - m), -1, keepdims=True)
        return (x - m) * jax.lax.rsqrt(v + eps) * g + b

    nh = ln(hidden_states.astype(f32), kp["norm1_g"], kp["norm1_b"], 1e-5)
    knh = nh.reshape(B, num_frames, L, C)[:, jnp.asarray(control_frame_index)].reshape(B, -1, C)
    q = nh @ kp["wq"].astype(f32)
    k = knh @ kp["wk"].astype(f32)
    v = sketch_hidden_states.astype(f32) @ kp["wv"].astype(f32)
    q = q.reshape(B, S, heads, head_dim).transpose(0, 2, 1, 3)
    k = k.reshape(B, -1, heads, head_dim).transpose(0, 2, 1, 3)
    v = v.reshape(B, -1, heads, head_dim).transpose(0, 2, 1, 3)
    q = ln(q, kp["qnorm_g"], kp["qnorm_b"], 1e-6)
    k = ln(k, kp["knorm_g"], kp["knorm_b"], 1e-6)
    s = jnp.einsum("bhqd,bhkd->bhqk", q, k) / math.sqrt(head_dim)
    p = jax.nn.softmax(s, axis=-1)
    o = jnp.einsum("bhqk,bhkd->bhqd", p, v)
    o = o.transpose(0, 2, 1, 3).reshape(B, S, heads * head_dim)
    o = o @ kp["wo"].astype(f32) + kp["bo"]
    a = ln(o, kp["norm2_g"], kp["norm2_b"], 1e-5) * sketch_mask
    im = ln(image_hidden_states.astype(f32), kp["norm3_g"], kp["norm3_b"], 1e-5) * image_mask
    w1 = jnp.concatenate([kp["ff_w1a"], kp["ff_w1b"]], axis=0).astype(f32)
    h = jnp.concatenate([a, im], axis=-1) @ w1 + kp["ff_b1"]
    h = jax.nn.gelu(h, approximate=True)
    return h @ kp["ff_w2"].astype(f32) + kp["ff_b2"]


# ----------------------------- main -----------------------------

if __name__ == "__main__":
    dim, heads, head_dim, time_embed_dim = 32, 2, 16, 64
    B, T, L = 2, 4, 16
    S = T * L
    control_frame_index = [0, 2]
    Tc = len(control_frame_index)

    root = jax.random.PRNGKey(0)
    kp_key, kh, ks, ki, ksm, kim, kt = jax.random.split(root, 7)

    params = prepare_params(init_params(kp_key, dim, heads, head_dim))

    hidden_states = jax.random.normal(kh, (B, S, dim), jnp.float32)
    sketch_hidden_states = jax.random.normal(ks, (B, Tc * L, dim), jnp.float32)
    image_hidden_states = jax.random.normal(ki, (B, S, dim), jnp.float32)
    sketch_mask = (jax.random.uniform(ksm, (B, S, 1)) > 0.3).astype(jnp.float32)
    image_mask = (jax.random.uniform(kim, (B, S, 1)) > 0.3).astype(jnp.float32)
    temb = jax.random.normal(kt, (B, time_embed_dim), jnp.float32)  # unused by forward

    out = cross_frame_block(params, hidden_states, sketch_hidden_states, image_hidden_states,
                            sketch_mask, image_mask, control_frame_index, temb, T,
                            heads, head_dim)
    jax.block_until_ready(out)
    assert out.shape == (B, S, dim)

    ref = cross_frame_block_reference(params, hidden_states, sketch_hidden_states,
                                      image_hidden_states, sketch_mask, image_mask,
                                      control_frame_index, T, heads, head_dim)
    max_err = float(jnp.max(jnp.abs(out.astype(jnp.float32) - ref)))
    assert max_err < 0.1, f"max abs error vs reference: {max_err}"
    print("KERNEL_OK")
</pallas_src>

<mosaic_0001>
module attributes {stable_mosaic.version = 11 : i64} {
  func.func @_norm_linear_kernel(%arg0: i32, %arg1: i32, %arg2: memref<128x32xf32, #tpu.memory_space<vmem>>, %arg3: memref<1x32xf32, #tpu.memory_space<vmem>>, %arg4: memref<1x32xf32, #tpu.memory_space<vmem>>, %arg5: memref<32x32xbf16, #tpu.memory_space<vmem>>, %arg6: memref<128x32xbf16, #tpu.memory_space<vmem>>) attributes {dimension_semantics = [#tpu.dimension_semantics<parallel>, #tpu.dimension_semantics<parallel>], iteration_bounds = array<i64: 1, 1>, scalar_prefetch = 0 : i64, scratch_operands = 0 : i64, tpu.core_type = #tpu.core_type<tc>, window_params = [{transform_indices = @transform_0, window_bounds = array<i64: 128, 32>}, {pipeline_mode = #tpu.pipeline_mode<synchronous>, transform_indices = @transform_1, window_bounds = array<i64: 1, 32>}, {pipeline_mode = #tpu.pipeline_mode<synchronous>, transform_indices = @transform_2, window_bounds = array<i64: 1, 32>}, {transform_indices = @transform_3, window_bounds = array<i64: 32, 32>}, {transform_indices = @transform_4, window_bounds = array<i64: 128, 32>}]} {
    %c0 = arith.constant 0 : index
    %c0_0 = arith.constant 0 : index
    %0 = vector.load %arg2[%c0, %c0_0] : memref<128x32xf32, #tpu.memory_space<vmem>>, vector<128x32xf32>
    %c0_1 = arith.constant 0 : index
    %c0_2 = arith.constant 0 : index
    %1 = vector.load %arg3[%c0_1, %c0_2] : memref<1x32xf32, #tpu.memory_space<vmem>>, vector<1x32xf32>
    %c0_3 = arith.constant 0 : index
    %c0_4 = arith.constant 0 : index
    %2 = vector.load %arg4[%c0_3, %c0_4] : memref<1x32xf32, #tpu.memory_space<vmem>>, vector<1x32xf32>
    %cst = arith.constant dense<0.000000e+00> : vector<128xf32>
    %3 = vector.multi_reduction <add>, %0, %cst [1] : vector<128x32xf32> to vector<128xf32>
    %4 = vector.shape_cast %3 : vector<128xf32> to vector<128x1xf32>
    %cst_5 = arith.constant 3.200000e+01 : f32
    %5 = vector.broadcast %cst_5 : f32 to vector<128x1xf32>
    %6 = arith.divf %4, %5 : vector<128x1xf32>
    %7 = vector.broadcast %6 : vector<128x1xf32> to vector<128x32xf32>
    %8 = arith.subf %0, %7 : vector<128x32xf32>
    %9 = arith.mulf %8, %8 : vector<128x32xf32>
    %cst_6 = arith.constant dense<0.000000e+00> : vector<128xf32>
    %10 = vector.multi_reduction <add>, %9, %cst_6 [1] : vector<128x32xf32> to vector<128xf32>
    %11 = vector.shape_cast %10 : vector<128xf32> to vector<128x1xf32>
    %cst_7 = arith.constant 3.200000e+01 : f32
    %12 = vector.broadcast %cst_7 : f32 to vector<128x1xf32>
    %13 = arith.divf %11, %12 : vector<128x1xf32>
    %14 = vector.broadcast %6 : vector<128x1xf32> to vector<128x32xf32>
    %15 = arith.subf %0, %14 : vector<128x32xf32>
    %cst_8 = arith.constant 9.99999974E-6 : f32
    %16 = vector.broadcast %cst_8 : f32 to vector<128x1xf32>
    %17 = arith.addf %13, %16 : vector<128x1xf32>
    %18 = math.rsqrt %17 : vector<128x1xf32>
    %19 = vector.broadcast %18 : vector<128x1xf32> to vector<128x32xf32>
    %20 = arith.mulf %15, %19 : vector<128x32xf32>
    %21 = vector.broadcast %1 : vector<1x32xf32> to vector<128x32xf32>
    %22 = arith.mulf %20, %21 : vector<128x32xf32>
    %23 = vector.broadcast %2 : vector<1x32xf32> to vector<128x32xf32>
    %24 = arith.addf %22, %23 : vector<128x32xf32>
    %25 = arith.truncf %24 : vector<128x32xf32> to vector<128x32xbf16>
    %c0_9 = arith.constant 0 : index
    %c0_10 = arith.constant 0 : index
    %26 = vector.load %arg5[%c0_9, %c0_10] : memref<32x32xbf16, #tpu.memory_space<vmem>>, vector<32x32xbf16>
    %cst_11 = arith.constant dense<0.000000e+00> : vector<128x32xf32>
    %27 = tpu.matmul %25, %26, %cst_11 {dimension_numbers = #tpu.dot_dimension_numbers<[1], [0], [0], [1], [0, 0, 1, 1], [], []>} : vector<128x32xbf16>, vector<32x32xbf16>, vector<128x32xf32> -> vector<128x32xf32>
    %28 = arith.truncf %27 : vector<128x32xf32> to vector<128x32xbf16>
    %c0_12 = arith.constant 0 : index
    %c0_13 = arith.constant 0 : index
    %29 = vector.load %arg6[%c0_12, %c0_13] : memref<128x32xbf16, #tpu.memory_space<vmem>>, vector<128x32xbf16>
    tpu.vector_store %arg6[%c0_12, %c0_13], %28 {strides = array<i32>} : memref<128x32xbf16, #tpu.memory_space<vmem>>, vector<128x32xbf16>,
    return
  }
  func.func @transform_0(%arg0: i32, %arg1: i32) -> (i32, i32) {
    %c0_i32 = arith.constant 0 : i32
    %c0_i32_0 = arith.constant 0 : i32
    return %arg0, %c0_i32 : i32, i32
  }
  func.func @transform_1(%arg0: i32, %arg1: i32) -> (i32, i32) {
    %c0_i32 = arith.constant 0 : i32
    %c0_i32_0 = arith.constant 0 : i32
    %c0_i32_1 = arith.constant 0 : i32
    return %c0_i32, %c0_i32_0 : i32, i32
  }
  func.func @transform_2(%arg0: i32, %arg1: i32) -> (i32, i32) {
    %c0_i32 = arith.constant 0 : i32
    %c0_i32_0 = arith.constant 0 : i32
    %c0_i32_1 = arith.constant 0 : i32
    return %c0_i32, %c0_i32_0 : i32, i32
  }
  func.func @transform_3(%arg0: i32, %arg1: i32) -> (i32, i32) {
    %c0_i32 = arith.constant 0 : i32
    %c0_i32_0 = arith.constant 0 : i32
    return %c0_i32, %arg1 : i32, i32
  }
  func.func @transform_4(%arg0: i32, %arg1: i32) -> (i32, i32) {
    %c0_i32 = arith.constant 0 : i32
    return %arg0, %arg1 : i32, i32
  }
}

</mosaic_0001>

<llo_original>
// kernel: tpu_custom_call.1
$region0: #{tpu_custom_call.1}
  #allocation0 [shape = 'u32[]', space=smem, size = 0x4, offset = 0x4, fixed_abs, tag = 'smem constant byte address 0x4 - core index']
  #allocation1 [shape = 'u32[144,128]{1,0:T(1,128)}', space=vmem, size = 0x12000, scoped, tag = 'internal scratch']
  %s0 = inlined_call_operand.vmem [shape: f32[128,32], index: 0, kind: input, shape index: {}]
  %s1 = inlined_call_operand.vmem [shape: f32[1,32], index: 1, kind: input, shape index: {}]
  %s2 = inlined_call_operand.vmem [shape: f32[1,32], index: 2, kind: input, shape index: {}]
  %s3 = inlined_call_operand.vmem [shape: bf16[32,32], index: 3, kind: input, shape index: {}]
  %s4 = inlined_call_operand.vmem [shape: bf16[128,32], index: 4, kind: output, shape index: {}]
  %s5 = sld [smem:[#allocation0]]
  $region26: #{tpu_custom_call.1} parent=0
    _
  %s7 = ssub.s32 1, %s5
  %s8 = scalar_select 0, %s7, %s5
  // Predicated region
  $region2: #{tpu_custom_call.1} parent=0 // pred_check
    _
  $region3: #{tpu_custom_call.1} parent=0 // pred_check_branch
    %10 = sbr.rel (0) target = $region5
  $region4: #{tpu_custom_call.1} parent=0 // pred_region
    _
  $region5: #{tpu_custom_call.1} parent=0 // pred_fallthru
    _
  // Predicated region
  $region6: #{tpu_custom_call.1} parent=0 // pred_check
    _
  $region7: #{tpu_custom_call.1} parent=0 // pred_check_branch
    %12 = sbr.rel (0) target = $region9
  $region8: #{tpu_custom_call.1} parent=0 // pred_region
    _
  $region9: #{tpu_custom_call.1} parent=0 // pred_fallthru
    _
  // Predicated region
  $region10: #{tpu_custom_call.1} parent=0 // pred_check
    _
  $region11: #{tpu_custom_call.1} parent=0 // pred_check_branch
    %14 = sbr.rel (0) target = $region13
  $region12: #{tpu_custom_call.1} parent=0 // pred_region
    _
  $region13: #{tpu_custom_call.1} parent=0 // pred_fallthru
    _
  // Predicated region
  $region14: #{tpu_custom_call.1} parent=0 // pred_check
    _
  $region15: #{tpu_custom_call.1} parent=0 // pred_check_branch
    %16 = sbr.rel (0) target = $region17
  $region16: #{tpu_custom_call.1} parent=0 // pred_region
    _
  $region17: #{tpu_custom_call.1} parent=0 // pred_fallthru
    _
  %v18 = vld [vmem:[%s0] sm:$0xff]
  %v19 = vld [vmem:[%s0 + $0x8] sm:$0xff]
  %v20 = vld [vmem:[%s0 + $0x10] sm:$0xff]
  %v21 = vld [vmem:[%s0 + $0x18] sm:$0xff]
  %v22 = vld [vmem:[%s0 + $0x20] sm:$0xff]
  %v23 = vld [vmem:[%s0 + $0x28] sm:$0xff]
  %v24 = vld [vmem:[%s0 + $0x30] sm:$0xff]
  %v25 = vld [vmem:[%s0 + $0x38] sm:$0xff]
  %v26 = vld [vmem:[%s0 + $0x40] sm:$0xff]
  %v27 = vld [vmem:[%s0 + $0x48] sm:$0xff]
  %v28 = vld [vmem:[%s0 + $0x50] sm:$0xff]
  %v29 = vld [vmem:[%s0 + $0x58] sm:$0xff]
  %v30 = vld [vmem:[%s0 + $0x60] sm:$0xff]
  %v31 = vld [vmem:[%s0 + $0x68] sm:$0xff]
  %v32 = vld [vmem:[%s0 + $0x70] sm:$0xff]
  %v33 = vld [vmem:[%s0 + $0x78] sm:$0xff]
  %v34 = vld [vmem:[%s1] sm:$0x1]
  %v35 = vld [vmem:[%s2] sm:$0x1]
  %vm36 = vcmask 261120
  %v37 = vsel %vm36, %v18, 0.0
  %38 = vadd.xlane.f32.xlu0 %v37
  %v39 = vpop.xlane.xlu0 %38
  %v40 = vsel %vm36, %v19, 0.0
  %41 = vadd.xlane.f32.xlu0 %v40
  %v42 = vpop.xlane.xlu0 %41
  %v43 = vsel %vm36, %v20, 0.0
  %44 = vadd.xlane.f32.xlu0 %v43
  %v45 = vpop.xlane.xlu0 %44
  %v46 = vsel %vm36, %v21, 0.0
  %47 = vadd.xlane.f32.xlu0 %v46
  %v48 = vpop.xlane.xlu0 %47
  %v49 = vsel %vm36, %v22, 0.0
  %50 = vadd.xlane.f32.xlu0 %v49
  %v51 = vpop.xlane.xlu0 %50
  %v52 = vsel %vm36, %v23, 0.0
  %53 = vadd.xlane.f32.xlu0 %v52
  %v54 = vpop.xlane.xlu0 %53
  %v55 = vsel %vm36, %v24, 0.0
  %56 = vadd.xlane.f32.xlu0 %v55
  %v57 = vpop.xlane.xlu0 %56
  %v58 = vsel %vm36, %v25, 0.0
  %59 = vadd.xlane.f32.xlu0 %v58
  %v60 = vpop.xlane.xlu0 %59
  %v61 = vsel %vm36, %v26, 0.0
  %62 = vadd.xlane.f32.xlu0 %v61
  %v63 = vpop.xlane.xlu0 %62
  %v64 = vsel %vm36, %v27, 0.0
  %65 = vadd.xlane.f32.xlu0 %v64
  %v66 = vpop.xlane.xlu0 %65
  %v67 = vsel %vm36, %v28, 0.0
  %68 = vadd.xlane.f32.xlu0 %v67
  %v69 = vpop.xlane.xlu0 %68
  %v70 = vsel %vm36, %v29, 0.0
  %71 = vadd.xlane.f32.xlu0 %v70
  %v72 = vpop.xlane.xlu0 %71
  %v73 = vsel %vm36, %v30, 0.0
  %74 = vadd.xlane.f32.xlu0 %v73
  %v75 = vpop.xlane.xlu0 %74
  %v76 = vsel %vm36, %v31, 0.0
  %77 = vadd.xlane.f32.xlu0 %v76
  %v78 = vpop.xlane.xlu0 %77
  %v79 = vsel %vm36, %v32, 0.0
  %80 = vadd.xlane.f32.xlu0 %v79
  %v81 = vpop.xlane.xlu0 %80
  %v82 = vsel %vm36, %v33, 0.0
  %83 = vadd.xlane.f32.xlu0 %v82
  %v84 = vpop.xlane.xlu0 %83
  %v85 = vrcp.pop 32.0
  %v86 = vmul.f32 %v39, %v85
  %v87 = vmul.f32 %v42, %v85
  %v88 = vmul.f32 %v45, %v85
  %v89 = vmul.f32 %v48, %v85
  %v90 = vmul.f32 %v51, %v85
  %v91 = vmul.f32 %v54, %v85
  %v92 = vmul.f32 %v57, %v85
  %v93 = vmul.f32 %v60, %v85
  %v94 = vmul.f32 %v63, %v85
  %v95 = vmul.f32 %v66, %v85
  %v96 = vmul.f32 %v69, %v85
  %v97 = vmul.f32 %v72, %v85
  %v98 = vmul.f32 %v75, %v85
  %v99 = vmul.f32 %v78, %v85
  %v100 = vmul.f32 %v81, %v85
  %v101 = vmul.f32 %v84, %v85
  %v102 = vsub.f32 %v18, %v86
  %v103 = vsub.f32 %v19, %v87
  %v104 = vsub.f32 %v20, %v88
  %v105 = vsub.f32 %v21, %v89
  %v106 = vsub.f32 %v22, %v90
  %v107 = vsub.f32 %v23, %v91
  %v108 = vsub.f32 %v24, %v92
  %v109 = vsub.f32 %v25, %v93
  %v110 = vsub.f32 %v26, %v94
  %v111 = vsub.f32 %v27, %v95
  %v112 = vsub.f32 %v28, %v96
  %v113 = vsub.f32 %v29, %v97
  %v114 = vsub.f32 %v30, %v98
  %v115 = vsub.f32 %v31, %v99
  %v116 = vsub.f32 %v32, %v100
  %v117 = vsub.f32 %v33, %v101
  %v118 = vmul.f32 %v102, %v102
  %v119 = vmul.f32 %v103, %v103
  %v120 = vmul.f32 %v104, %v104
  %v121 = vmul.f32 %v105, %v105
  %v122 = vmul.f32 %v106, %v106
  %v123 = vmul.f32 %v107, %v107
  %v124 = vmul.f32 %v108, %v108
  %v125 = vmul.f32 %v109, %v109
  %v126 = vmul.f32 %v110, %v110
  %v127 = vmul.f32 %v111, %v111
  %v128 = vmul.f32 %v112, %v112
  %v129 = vmul.f32 %v113, %v113
  %v130 = vmul.f32 %v114, %v114
  %v131 = vmul.f32 %v115, %v115
  %v132 = vmul.f32 %v116, %v116
  %v133 = vmul.f32 %v117, %v117
  %v134 = vsel %vm36, %v118, 0.0
  %135 = vadd.xlane.f32.xlu0 %v134
  %v136 = vpop.xlane.xlu0 %135
  %v137 = vsel %vm36, %v119, 0.0
  %138 = vadd.xlane.f32.xlu0 %v137
  %v139 = vpop.xlane.xlu0 %138
  %v140 = vsel %vm36, %v120, 0.0
  %141 = vadd.xlane.f32.xlu0 %v140
  %v142 = vpop.xlane.xlu0 %141
  %v143 = vsel %vm36, %v121, 0.0
  %144 = vadd.xlane.f32.xlu0 %v143
  %v145 = vpop.xlane.xlu0 %144
  %v146 = vsel %vm36, %v122, 0.0
  %147 = vadd.xlane.f32.xlu0 %v146
  %v148 = vpop.xlane.xlu0 %147
  %v149 = vsel %vm36, %v123, 0.0
  %150 = vadd.xlane.f32.xlu0 %v149
  %v151 = vpop.xlane.xlu0 %150
  %v152 = vsel %vm36, %v124, 0.0
  %153 = vadd.xlane.f32.xlu0 %v152
  %v154 = vpop.xlane.xlu0 %153
  %v155 = vsel %vm36, %v125, 0.0
  %156 = vadd.xlane.f32.xlu0 %v155
  %v157 = vpop.xlane.xlu0 %156
  %v158 = vsel %vm36, %v126, 0.0
  %159 = vadd.xlane.f32.xlu0 %v158
  %v160 = vpop.xlane.xlu0 %159
  %v161 = vsel %vm36, %v127, 0.0
  %162 = vadd.xlane.f32.xlu0 %v161
  %v163 = vpop.xlane.xlu0 %162
  %v164 = vsel %vm36, %v128, 0.0
  %165 = vadd.xlane.f32.xlu0 %v164
  %v166 = vpop.xlane.xlu0 %165
  %v167 = vsel %vm36, %v129, 0.0
  %168 = vadd.xlane.f32.xlu0 %v167
  %v169 = vpop.xlane.xlu0 %168
  %v170 = vsel %vm36, %v130, 0.0
  %171 = vadd.xlane.f32.xlu0 %v170
  %v172 = vpop.xlane.xlu0 %171
  %v173 = vsel %vm36, %v131, 0.0
  %174 = vadd.xlane.f32.xlu0 %v173
  %v175 = vpop.xlane.xlu0 %174
  %v176 = vsel %vm36, %v132, 0.0
  %177 = vadd.xlane.f32.xlu0 %v176
  %v178 = vpop.xlane.xlu0 %177
  %v179 = vsel %vm36, %v133, 0.0
  %180 = vadd.xlane.f32.xlu0 %v179
  %v181 = vpop.xlane.xlu0 %180
  %v182 = vmul.f32 %v136, %v85
  %v183 = vmul.f32 %v139, %v85
  %v184 = vmul.f32 %v142, %v85
  %v185 = vmul.f32 %v145, %v85
  %v186 = vmul.f32 %v148, %v85
  %v187 = vmul.f32 %v151, %v85
  %v188 = vmul.f32 %v154, %v85
  %v189 = vmul.f32 %v157, %v85
  %v190 = vmul.f32 %v160, %v85
  %v191 = vmul.f32 %v163, %v85
  %v192 = vmul.f32 %v166, %v85
  %v193 = vmul.f32 %v169, %v85
  %v194 = vmul.f32 %v172, %v85
  %v195 = vmul.f32 %v175, %v85
  %v196 = vmul.f32 %v178, %v85
  %v197 = vmul.f32 %v181, %v85
  %v198 = vadd.f32 %v182, 1e-05
  %v199 = vadd.f32 %v183, 1e-05
  %v200 = vadd.f32 %v184, 1e-05
  %v201 = vadd.f32 %v185, 1e-05
  %v202 = vadd.f32 %v186, 1e-05
  %v203 = vadd.f32 %v187, 1e-05
  %v204 = vadd.f32 %v188, 1e-05
  %v205 = vadd.f32 %v189, 1e-05
  %v206 = vadd.f32 %v190, 1e-05
  %v207 = vadd.f32 %v191, 1e-05
  %v208 = vadd.f32 %v192, 1e-05
  %v209 = vadd.f32 %v193, 1e-05
  %v210 = vadd.f32 %v194, 1e-05
  %v211 = vadd.f32 %v195, 1e-05
  %v212 = vadd.f32 %v196, 1e-05
  %v213 = vadd.f32 %v197, 1e-05
  %v214 = vrsqrt.pop %v198
  %v215 = vrsqrt.pop %v199
  %v216 = vrsqrt.pop %v200
  %v217 = vrsqrt.pop %v201
  %v218 = vrsqrt.pop %v202
  %v219 = vrsqrt.pop %v203
  %v220 = vrsqrt.pop %v204
  %v221 = vrsqrt.pop %v205
  %v222 = vrsqrt.pop %v206
  %v223 = vrsqrt.pop %v207
  %v224 = vrsqrt.pop %v208
  %v225 = vrsqrt.pop %v209
  %v226 = vrsqrt.pop %v210
  %v227 = vrsqrt.pop %v211
  %v228 = vrsqrt.pop %v212
  %v229 = vrsqrt.pop %v213
  %v230 = vmul.f32 %v102, %v214
  %v231 = vmul.f32 %v103, %v215
  %v232 = vmul.f32 %v104, %v216
  %v233 = vmul.f32 %v105, %v217
  %v234 = vmul.f32 %v106, %v218
  %v235 = vmul.f32 %v107, %v219
  %v236 = vmul.f32 %v108, %v220
  %v237 = vmul.f32 %v109, %v221
  %v238 = vmul.f32 %v110, %v222
  %v239 = vmul.f32 %v111, %v223
  %v240 = vmul.f32 %v112, %v224
  %v241 = vmul.f32 %v113, %v225
  %v242 = vmul.f32 %v114, %v226
  %v243 = vmul.f32 %v115, %v227
  %v244 = vmul.f32 %v116, %v228
  %v245 = vmul.f32 %v117, %v229
  %v247 = vlaneseq
  %v248 = vshrl.u32 %v247, 7
  %v249 = vsub.s32 0, %v248
  %v250 = vrot.slane %v34, %v249
  %v252 = vmul.f32 %v230, %v250
  %v253 = vmul.f32 %v231, %v250
  %v254 = vmul.f32 %v232, %v250
  %v255 = vmul.f32 %v233, %v250
  %v256 = vmul.f32 %v234, %v250
  %v257 = vmul.f32 %v235, %v250
  %v258 = vmul.f32 %v236, %v250
  %v259 = vmul.f32 %v237, %v250
  %v260 = vmul.f32 %v238, %v250
  %v261 = vmul.f32 %v239, %v250
  %v262 = vmul.f32 %v240, %v250
  %v263 = vmul.f32 %v241, %v250
  %v264 = vmul.f32 %v242, %v250
  %v265 = vmul.f32 %v243, %v250
  %v266 = vmul.f32 %v244, %v250
  %v267 = vmul.f32 %v245, %v250
  %v269 = vlaneseq
  %v270 = vshrl.u32 %v269, 7
  %v271 = vsub.s32 0, %v270
  %v272 = vrot.slane %v35, %v271
  %v274 = vadd.f32 %v252, %v272
  %v275 = vadd.f32 %v253, %v272
  %v276 = vadd.f32 %v254, %v272
  %v277 = vadd.f32 %v255, %v272
  %v278 = vadd.f32 %v256, %v272
  %v279 = vadd.f32 %v257, %v272
  %v280 = vadd.f32 %v258, %v272
  %v281 = vadd.f32 %v259, %v272
  %v282 = vadd.f32 %v260, %v272
  %v283 = vadd.f32 %v261, %v272
  %v284 = vadd.f32 %v262, %v272
  %v285 = vadd.f32 %v263, %v272
  %v286 = vadd.f32 %v264, %v272
  %v287 = vadd.f32 %v265, %v272
  %v288 = vadd.f32 %v266, %v272
  %v289 = vadd.f32 %v267, %v272
  %v290 = vpack.c.bf16 %v275, %v274
  %v291 = vpack.c.bf16 %v277, %v276
  %v292 = vpack.c.bf16 %v279, %v278
  %v293 = vpack.c.bf16 %v281, %v280
  %v294 = vpack.c.bf16 %v283, %v282
  %v295 = vpack.c.bf16 %v285, %v284
  %v296 = vpack.c.bf16 %v287, %v286
  %v297 = vpack.c.bf16 %v289, %v288
  %v298 = vld [vmem:[%s3] sm:$0xf]
  %v299 = vld [vmem:[%s3 + $0x4] sm:$0xf]
  %v300 = vld [vmem:[%s3 + $0x8] sm:$0xf]
  %v301 = vld [vmem:[%s3 + $0xc] sm:$0xf]
  %v306 = vunpack.c.l.b16 %v298
  %v307 = vunpack.c.l.b16 %v299
  %v308 = vunpack.c.l.b16 %v300
  %v309 = vunpack.c.l.b16 %v301
  %v310 = vpack.c.b16 %v307, %v306
  %v311 = vpack.c.b16 %v309, %v308
  %v315 = vsel %vm36, %v290, 0
  %v318 = vsel %vm36, %v291, 0
  %v321 = vsel %vm36, %v292, 0
  %v324 = vsel %vm36, %v293, 0
  %v327 = vsel %vm36, %v294, 0
  %v330 = vsel %vm36, %v295, 0
  %v333 = vsel %vm36, %v296, 0
  %v336 = vsel %vm36, %v297, 0
  %338 = vmatprep.subr.bf16.mxu0 0
  %339 = vmatpush1.bf16.msra.mxu0 0
  %340 = vmatprep.subr.bf16.mxu0 0
  %341 = vmatpush1.bf16.msra.mxu0 0
  %342 = vmatprep.subr.bf16.mxu0 0
  %343 = vmatpush1.bf16.msra.mxu0 0
  %344 = vmatprep.subr.bf16.mxu0 0
  %345 = vmatpush1.bf16.msra.mxu0 0
  %346 = vmatprep.subr.bf16.mxu0 0
  %347 = vmatpush1.bf16.msra.mxu0 0
  %348 = vmatprep.subr.bf16.mxu0 0
  %349 = vmatpush1.bf16.msra.mxu0 0
  %350 = vmatprep.subr.bf16.mxu0 0
  %351 = vmatpush1.bf16.msra.mxu0 %v311
  %352 = vmatprep.subr.bf16.mxu0 0
  %353 = vmatpush1.bf16.msra.mxu0 %v310
  %354 = vmatprep.subr.bf16.mxu0 0
  %355 = vmatpush2.bf16.msra.mxu0 0
  %356 = vmatprep.subr.bf16.mxu0 0
  %357 = vmatpush2.bf16.msra.mxu0 0
  %358 = vmatprep.subr.bf16.mxu0 0
  %359 = vmatpush2.bf16.msra.mxu0 0
  %360 = vmatprep.subr.bf16.mxu0 0
  %361 = vmatpush2.bf16.msra.mxu0 0
  %362 = vmatprep.subr.bf16.mxu0 0
  %363 = vmatpush2.bf16.msra.mxu0 0
  %364 = vmatprep.subr.bf16.mxu0 0
  %365 = vmatpush2.bf16.msra.mxu0 0
  %366 = vmatprep.subr.bf16.mxu0 0
  %367 = vmatpush2.bf16.msra.mxu0 0
  %368 = vmatprep.subr.bf16.mxu0 0
  %369 = vmatpush2.bf16.msra.mxu0 0
  %370 = vmatprep.mubr.bf16.mxu0 0
  %371 = vmatmul.mubr.bf16.gmra.mxu0 %v315
  %v372 = vpop.f32.mrf.mxu0
  %v373 = vadd.f32 0.0, %v372
  %v374 = vpop.f32.mrf.mxu0
  %v375 = vpop.f32.mrf.mxu0
  %v376 = vadd.f32 0.0, %v375
  %v377 = vpop.f32.mrf.mxu0
  %378 = vmatprep.mubr.bf16.mxu0 0
  %379 = vmatmul.mubr.bf16.gmra.mxu0 %v318
  %v380 = vpop.f32.mrf.mxu0
  %v381 = vadd.f32 0.0, %v380
  %v382 = vpop.f32.mrf.mxu0
  %v383 = vpop.f32.mrf.mxu0
  %v384 = vadd.f32 0.0, %v383
  %v385 = vpop.f32.mrf.mxu0
  %386 = vmatprep.mubr.bf16.mxu0 0
  %387 = vmatmul.mubr.bf16.gmra.mxu0 %v321
  %v388 = vpop.f32.mrf.mxu0
  %v389 = vadd.f32 0.0, %v388
  %v390 = vpop.f32.mrf.mxu0
  %v391 = vpop.f32.mrf.mxu0
  %v392 = vadd.f32 0.0, %v391
  %v393 = vpop.f32.mrf.mxu0
  %394 = vmatprep.mubr.bf16.mxu0 0
  %395 = vmatmul.mubr.bf16.gmra.mxu0 %v324
  %v396 = vpop.f32.mrf.mxu0
  %v397 = vadd.f32 0.0, %v396
  %v398 = vpop.f32.mrf.mxu0
  %v399 = vpop.f32.mrf.mxu0
  %v400 = vadd.f32 0.0, %v399
  %v401 = vpop.f32.mrf.mxu0
  %402 = vmatprep.mubr.bf16.mxu0 0
  %403 = vmatmul.mubr.bf16.gmra.mxu0 %v327
  %v404 = vpop.f32.mrf.mxu0
  %v405 = vadd.f32 0.0, %v404
  %v406 = vpop.f32.mrf.mxu0
  %v407 = vpop.f32.mrf.mxu0
  %v408 = vadd.f32 0.0, %v407
  %v409 = vpop.f32.mrf.mxu0
  %410 = vmatprep.mubr.bf16.mxu0 0
  %411 = vmatmul.mubr.bf16.gmra.mxu0 %v330
  %v412 = vpop.f32.mrf.mxu0
  %v413 = vadd.f32 0.0, %v412
  %v414 = vpop.f32.mrf.mxu0
  %v415 = vpop.f32.mrf.mxu0
  %v416 = vadd.f32 0.0, %v415
  %v417 = vpop.f32.mrf.mxu0
  %418 = vmatprep.mubr.bf16.mxu0 0
  %419 = vmatmul.mubr.bf16.gmra.mxu0 %v333
  %v420 = vpop.f32.mrf.mxu0
  %v421 = vadd.f32 0.0, %v420
  %v422 = vpop.f32.mrf.mxu0
  %v423 = vpop.f32.mrf.mxu0
  %v424 = vadd.f32 0.0, %v423
  %v425 = vpop.f32.mrf.mxu0
  %426 = vmatprep.mubr.bf16.mxu0 0
  %427 = vmatmul.mubr.bf16.gmra.mxu0 %v336
  %v428 = vpop.f32.mrf.mxu0
  %v429 = vadd.f32 0.0, %v428
  %v430 = vpop.f32.mrf.mxu0
  %v431 = vpop.f32.mrf.mxu0
  %v432 = vadd.f32 0.0, %v431
  %v433 = vpop.f32.mrf.mxu0
  %434 = vdwg.mxu0
  %v435 = vpack.c.bf16 %v376, %v373
  %v436 = vpack.c.bf16 %v384, %v381
  %v437 = vpack.c.bf16 %v392, %v389
  %v438 = vpack.c.bf16 %v400, %v397
  %v439 = vpack.c.bf16 %v408, %v405
  %v440 = vpack.c.bf16 %v416, %v413
  %v441 = vpack.c.bf16 %v424, %v421
  %v442 = vpack.c.bf16 %v432, %v429
  %v451 = vunpack.c.l.b16 %v435
  %v452 = vunpack.c.h.b16 %v435
  %v453 = vunpack.c.l.b16 %v436
  %v454 = vunpack.c.h.b16 %v436
  %v455 = vunpack.c.l.b16 %v437
  %v456 = vunpack.c.h.b16 %v437
  %v457 = vunpack.c.l.b16 %v438
  %v458 = vunpack.c.h.b16 %v438
  %v459 = vunpack.c.l.b16 %v439
  %v460 = vunpack.c.h.b16 %v439
  %v461 = vunpack.c.l.b16 %v440
  %v462 = vunpack.c.h.b16 %v440
  %v463 = vunpack.c.l.b16 %v441
  %v464 = vunpack.c.h.b16 %v441
  %v465 = vunpack.c.l.b16 %v442
  %v466 = vunpack.c.h.b16 %v442
  %v467 = vpack.c.b16 %v451, %v451
  %v468 = vpack.c.b16 %v452, %v452
  %v469 = vpack.c.b16 %v453, %v453
  %v470 = vpack.c.b16 %v454, %v454
  %v471 = vpack.c.b16 %v455, %v455
  %v472 = vpack.c.b16 %v456, %v456
  %v473 = vpack.c.b16 %v457, %v457
  %v474 = vpack.c.b16 %v458, %v458
  %v475 = vpack.c.b16 %v459, %v459
  %v476 = vpack.c.b16 %v460, %v460
  %v477 = vpack.c.b16 %v461, %v461
  %v478 = vpack.c.b16 %v462, %v462
  %v479 = vpack.c.b16 %v463, %v463
  %v480 = vpack.c.b16 %v464, %v464
  %v481 = vpack.c.b16 %v465, %v465
  %v482 = vpack.c.b16 %v466, %v466
  %vm499 = vcmask 257024
  %500 = vst.msk [vmem:[%s4] sm:$0xf] %vm499, %v467
  %501 = vst.msk [vmem:[%s4 + $0x4] sm:$0xf] %vm499, %v468
  %502 = vst.msk [vmem:[%s4 + $0x8] sm:$0xf] %vm499, %v469
  %503 = vst.msk [vmem:[%s4 + $0xc] sm:$0xf] %vm499, %v470
  %504 = vst.msk [vmem:[%s4 + $0x10] sm:$0xf] %vm499, %v471
  %505 = vst.msk [vmem:[%s4 + $0x14] sm:$0xf] %vm499, %v472
  %506 = vst.msk [vmem:[%s4 + $0x18] sm:$0xf] %vm499, %v473
  %507 = vst.msk [vmem:[%s4 + $0x1c] sm:$0xf] %vm499, %v474
  %508 = vst.msk [vmem:[%s4 + $0x20] sm:$0xf] %vm499, %v475
  %509 = vst.msk [vmem:[%s4 + $0x24] sm:$0xf] %vm499, %v476
  %510 = vst.msk [vmem:[%s4 + $0x28] sm:$0xf] %vm499, %v477
  %511 = vst.msk [vmem:[%s4 + $0x2c] sm:$0xf] %vm499, %v478
  %512 = vst.msk [vmem:[%s4 + $0x30] sm:$0xf] %vm499, %v479
  %513 = vst.msk [vmem:[%s4 + $0x34] sm:$0xf] %vm499, %v480
  %514 = vst.msk [vmem:[%s4 + $0x38] sm:$0xf] %vm499, %v481
  %515 = vst.msk [vmem:[%s4 + $0x3c] sm:$0xf] %vm499, %v482
  // Predicated region
  $region18: #{tpu_custom_call.1} parent=0 // pred_check
    _
  $region19: #{tpu_custom_call.1} parent=0 // pred_check_branch
    %517 = sbr.rel (0) target = $region21
  $region20: #{tpu_custom_call.1} parent=0 // pred_region
    _
  $region21: #{tpu_custom_call.1} parent=0 // pred_fallthru
    _
  // Predicated region
  $region22: #{tpu_custom_call.1} parent=0 // pred_check
    _
  $region23: #{tpu_custom_call.1} parent=0 // pred_check_branch
    %519 = sbr.rel (0) target = $region25
  $region24: #{tpu_custom_call.1} parent=0 // pred_region
    _
  $region25: #{tpu_custom_call.1} parent=0 // pred_fallthru
    _

</llo_original>
